<compile_context>
chip_gen: v5e
topology: v5e:2x2
jax: 0.10.0
libtpu: 0.0.40
codegen_flags: <defaults>
</compile_context>

<pallas_src>
import functools

import jax
import jax.numpy as jnp
from jax.experimental import pallas as pl
from jax.experimental.pallas import tpu as pltpu


# Per-core lane work needed before a megacore (v7x) 2-way batch split pays.
_MIN_LANES_PER_CORE = 32 * 1024


@functools.lru_cache(maxsize=1)
def _num_tensorcores() -> int:
    """Best-effort TensorCore count for one launch (v5e/v6e: 1, v7x: 2).

    Falls back to 1, which is always correct (single grid block), just not
    megacore-sharded.  Clamped to 2 so a slice-level core count can never
    inflate the grid."""
    try:
        info = pltpu.get_tpu_info()
        for attr in ("num_cores", "core_count", "num_tensorcores",
                     "tensorcore_count", "cores_per_chip"):
            v = getattr(info, attr, None)
            if isinstance(v, int) and v > 0:
                return min(v, 2)
    except Exception:
        pass
    return 1


def _conv_mm_kernel(w_ref, b_ref, p_ref, o_ref):
    # w_ref: (Cout, Kp)       bf16, resident every grid step
    # b_ref: (Cout, 1)        f32
    # p_ref: (nb, Kp, HWp)    bf16 im2col block (nb images)
    # o_ref: (nb, Cout, HWp)  f32, already in final (batch, chan, pixel) layout
    w = w_ref[...]
    bvec = b_ref[...]
    nb = p_ref.shape[0]
    # nb is a handful of images per block; a static unrolled loop of small
    # lane-dense MXU dots is fine (the kernel is memory/overhead bound; MXU
    # utilization at Cout=8, K=48 is intentionally not chased).
    for i in range(nb):
        acc = jnp.dot(w, p_ref[i], preferred_element_type=jnp.float32)
        o_ref[i] = (acc + bvec).astype(o_ref.dtype)


def conv3x3_pallas(xs_nchw, weight_oihw, bias):
    """3x3 conv, stride 1, SAME padding, with bias.  xs_nchw: (NB, Cin, H, W)."""
    NB, Cin, H, W = xs_nchw.shape
    Cout = weight_oihw.shape[0]
    HW = H * W
    K = 9 * Cin
    Kp = pl.cdiv(K, 16) * 16          # bf16-sublane-clean contraction dim
    HWp = pl.cdiv(HW, 128) * 128      # lane-dense pixel axis

    # ---- im2col in the (jit-fused) wrapper ---------------------------------
    # row index inside each image = (kh*3 + kw)*Cin + c, matching w2d below.
    x_pad = jnp.pad(xs_nchw, ((0, 0), (0, 0), (1, 1), (1, 1)))
    taps = [x_pad[:, :, dh:dh + H, dw:dw + W]
            for dh in range(3) for dw in range(3)]        # 9 x (NB,Cin,H,W)
    patches = jnp.stack(taps, axis=1)                     # (NB, 9, Cin, H, W)
    patches = patches.reshape(NB, K, HW)
    patches = jnp.pad(patches, ((0, 0), (0, Kp - K), (0, HWp - HW)))
    patches = patches.astype(jnp.bfloat16)                # halve HBM read bytes

    # weights -> (Cout, (kh*3+kw)*Cin + c) bf16, bias -> (Cout, 1) f32
    w2d = weight_oihw.transpose(0, 2, 3, 1).reshape(Cout, K)
    w2d = jnp.pad(w2d, ((0, 0), (0, Kp - K))).astype(jnp.bfloat16)
    b2d = bias.reshape(Cout, 1).astype(jnp.float32)

    # ---- grid selection: 1 block unless megacore split actually pays -------
    num_tc = _num_tensorcores()
    grid_n = 1
    if (num_tc > 1 and NB >= num_tc
            and (NB // num_tc) * HWp >= _MIN_LANES_PER_CORE):
        grid_n = num_tc
    nb_blk = pl.cdiv(NB, grid_n)
    NBp = nb_blk * grid_n
    if NBp > NB:
        patches = jnp.pad(patches, ((0, NBp - NB), (0, 0), (0, 0)))

    # ---- VMEM budget / compiler params --------------------------------------
    blk_in_bytes = nb_blk * Kp * HWp * 2          # bf16 patch block
    blk_out_bytes = nb_blk * Cout * HWp * 4       # f32 output block
    resident = Cout * Kp * 2 + Cout * 4           # weights + bias
    vmem_needed = 2 * (blk_in_bytes + blk_out_bytes) + resident  # double-buffered
    cp_kwargs = dict(dimension_semantics=("parallel",))
    if vmem_needed > 12 * (1 << 20):              # above smallest scoped default
        cp_kwargs["vmem_limit_bytes"] = min(int(vmem_needed * 3 // 2),
                                            48 * (1 << 20))

    cost = pl.CostEstimate(
        flops=2 * NBp * Cout * Kp * HWp,
        transcendentals=0,
        bytes_accessed=(NBp * Kp * HWp * 2 + Cout * Kp * 2
                        + NBp * Cout * HWp * 4 + Cout * 4),
    )

    out = pl.pallas_call(
        _conv_mm_kernel,
        out_shape=jax.ShapeDtypeStruct((NBp, Cout, HWp), xs_nchw.dtype),
        grid=(grid_n,),
        in_specs=[
            pl.BlockSpec((Cout, Kp), lambda m: (0, 0)),
            pl.BlockSpec((Cout, 1), lambda m: (0, 0)),
            pl.BlockSpec((nb_blk, Kp, HWp), lambda m: (m, 0, 0)),
        ],
        out_specs=pl.BlockSpec((nb_blk, Cout, HWp), lambda m: (m, 0, 0)),
        compiler_params=pltpu.CompilerParams(**cp_kwargs),
        cost_estimate=cost,
    )(w2d, b2d, patches)

    # (NBp, Cout, HWp) -> (NB, Cout, H, W): slicing + reshape only, NO transpose.
    return out[:NB, :, :HW].reshape(NB, Cout, H, W)


@jax.jit
def module_parallel_forward(x_parallel, weight, bias):
    """ModuleParallel.forward: apply the same wrapped conv to every entry of
    the list.  All branches are batched into one Pallas launch, then split
    back into a list to preserve list-in / list-out semantics."""
    # TODO(synk): only the canonical Conv2d(k=3, s=1, p=1) wrapped module is
    # lowered here; other wrapped modules (or ragged per-branch spatial sizes,
    # which PyTorch's ModuleParallel allows) would need their own launches.
    sizes = [x.shape[0] for x in x_parallel]
    xs = jnp.concatenate(x_parallel, axis=0)
    out = conv3x3_pallas(xs, weight, bias)
    outs, off = [], 0
    for n in sizes:
        outs.append(out[off:off + n])
        off += n
    return outs


def _reference_conv(x_nchw, weight_oihw, bias):
    y = jax.lax.conv_general_dilated(
        x_nchw, weight_oihw, window_strides=(1, 1), padding="SAME",
        dimension_numbers=("NCHW", "OIHW", "NCHW"))
    return y + bias[None, :, None, None]


if __name__ == "__main__":
    key = jax.random.PRNGKey(0)
    k1, k2, k3, k4, k5 = jax.random.split(key, 5)

    N, Cin, H, W, Cout = 2, 4, 16, 16, 8
    # list of 3 "parallel" inputs (e.g. RGB / depth / fused branches), NCHW
    x_parallel = [
        jax.random.normal(k1, (N, Cin, H, W), dtype=jnp.float32),
        jax.random.normal(k2, (N, Cin, H, W), dtype=jnp.float32),
        jax.random.normal(k3, (N, Cin, H, W), dtype=jnp.float32),
    ]
    # deterministic parameters of the wrapped Conv2d(4, 8, 3, padding=1)
    weight = 0.1 * jax.random.normal(k4, (Cout, Cin, 3, 3), dtype=jnp.float32)
    bias = 0.05 * jax.random.normal(k5, (Cout,), dtype=jnp.float32)

    outs = module_parallel_forward(x_parallel, weight, bias)
    outs = [jax.block_until_ready(o) for o in outs]

    # correctness check against the f32 XLA conv reference, branch by branch.
    # bf16 operands (f32 accumulate) -> relaxed tolerance vs the f32 reference.
    ok = True
    for xi, oi in zip(x_parallel, outs):
        ref = _reference_conv(xi, weight, bias)
        ok = ok and bool(jnp.allclose(oi, ref, atol=3e-2, rtol=3e-2))
        assert oi.shape == (N, Cout, H, W)

    print("KERNEL_OK" if ok else "MISMATCH")
</pallas_src>

<mosaic_0001>
module attributes {stable_mosaic.version = 11 : i64} {
  func.func @_conv_mm_kernel(%arg0: i32, %arg1: memref<8x48xbf16, #tpu.memory_space<vmem>>, %arg2: memref<8x1xf32, #tpu.memory_space<vmem>>, %arg3: memref<6x48x256xbf16, #tpu.memory_space<vmem>>, %arg4: memref<6x8x256xf32, #tpu.memory_space<vmem>>) attributes {dimension_semantics = [#tpu.dimension_semantics<parallel>], iteration_bounds = array<i64: 1>, scalar_prefetch = 0 : i64, scratch_operands = 0 : i64, tpu.core_type = #tpu.core_type<tc>, window_params = [{pipeline_mode = #tpu.pipeline_mode<synchronous>, transform_indices = @transform_0, window_bounds = array<i64: 8, 48>}, {pipeline_mode = #tpu.pipeline_mode<synchronous>, transform_indices = @transform_1, window_bounds = array<i64: 8, 1>}, {transform_indices = @transform_2, window_bounds = array<i64: 6, 48, 256>}, {transform_indices = @transform_3, window_bounds = array<i64: 6, 8, 256>}]} {
    %c0 = arith.constant 0 : index
    %c0_0 = arith.constant 0 : index
    %0 = vector.load %arg1[%c0, %c0_0] : memref<8x48xbf16, #tpu.memory_space<vmem>>, vector<8x48xbf16>
    %c0_1 = arith.constant 0 : index
    %c0_2 = arith.constant 0 : index
    %1 = vector.load %arg2[%c0_1, %c0_2] : memref<8x1xf32, #tpu.memory_space<vmem>>, vector<8x1xf32>
    %c0_3 = arith.constant 0 : index
    %c0_4 = arith.constant 0 : index
    %c0_5 = arith.constant 0 : index
    %2 = vector.load %arg3[%c0_3, %c0_4, %c0_5] : memref<6x48x256xbf16, #tpu.memory_space<vmem>>, vector<1x48x256xbf16>
    %3 = vector.shape_cast %2 : vector<1x48x256xbf16> to vector<48x256xbf16>
    %cst = arith.constant dense<0.000000e+00> : vector<8x256xf32>
    %4 = tpu.matmul %0, %3, %cst {dimension_numbers = #tpu.dot_dimension_numbers<[1], [0], [0], [1], [0, 0, 1, 1], [], []>} : vector<8x48xbf16>, vector<48x256xbf16>, vector<8x256xf32> -> vector<8x256xf32>
    %5 = vector.broadcast %1 : vector<8x1xf32> to vector<8x256xf32>
    %6 = arith.addf %4, %5 : vector<8x256xf32>
    %c0_6 = arith.constant 0 : index
    %c0_7 = arith.constant 0 : index
    %c0_8 = arith.constant 0 : index
    %7 = vector.load %arg4[%c0_6, %c0_7, %c0_8] : memref<6x8x256xf32, #tpu.memory_space<vmem>>, vector<1x8x256xf32>
    %8 = vector.shape_cast %7 : vector<1x8x256xf32> to vector<8x256xf32>
    %9 = vector.shape_cast %6 : vector<8x256xf32> to vector<1x8x256xf32>
    tpu.vector_store %arg4[%c0_6, %c0_7, %c0_8], %9 {strides = array<i32>} : memref<6x8x256xf32, #tpu.memory_space<vmem>>, vector<1x8x256xf32>,
    %c1 = arith.constant 1 : index
    %c0_9 = arith.constant 0 : index
    %c0_10 = arith.constant 0 : index
    %10 = vector.load %arg3[%c1, %c0_9, %c0_10] : memref<6x48x256xbf16, #tpu.memory_space<vmem>>, vector<1x48x256xbf16>
    %11 = vector.shape_cast %10 : vector<1x48x256xbf16> to vector<48x256xbf16>
    %cst_11 = arith.constant dense<0.000000e+00> : vector<8x256xf32>
    %12 = tpu.matmul %0, %11, %cst_11 {dimension_numbers = #tpu.dot_dimension_numbers<[1], [0], [0], [1], [0, 0, 1, 1], [], []>} : vector<8x48xbf16>, vector<48x256xbf16>, vector<8x256xf32> -> vector<8x256xf32>
    %13 = vector.broadcast %1 : vector<8x1xf32> to vector<8x256xf32>
    %14 = arith.addf %12, %13 : vector<8x256xf32>
    %c1_12 = arith.constant 1 : index
    %c0_13 = arith.constant 0 : index
    %c0_14 = arith.constant 0 : index
    %15 = vector.load %arg4[%c1_12, %c0_13, %c0_14] : memref<6x8x256xf32, #tpu.memory_space<vmem>>, vector<1x8x256xf32>
    %16 = vector.shape_cast %15 : vector<1x8x256xf32> to vector<8x256xf32>
    %17 = vector.shape_cast %14 : vector<8x256xf32> to vector<1x8x256xf32>
    tpu.vector_store %arg4[%c1_12, %c0_13, %c0_14], %17 {strides = array<i32>} : memref<6x8x256xf32, #tpu.memory_space<vmem>>, vector<1x8x256xf32>,
    %c2 = arith.constant 2 : index
    %c0_15 = arith.constant 0 : index
    %c0_16 = arith.constant 0 : index
    %18 = vector.load %arg3[%c2, %c0_15, %c0_16] : memref<6x48x256xbf16, #tpu.memory_space<vmem>>, vector<1x48x256xbf16>
    %19 = vector.shape_cast %18 : vector<1x48x256xbf16> to vector<48x256xbf16>
    %cst_17 = arith.constant dense<0.000000e+00> : vector<8x256xf32>
    %20 = tpu.matmul %0, %19, %cst_17 {dimension_numbers = #tpu.dot_dimension_numbers<[1], [0], [0], [1], [0, 0, 1, 1], [], []>} : vector<8x48xbf16>, vector<48x256xbf16>, vector<8x256xf32> -> vector<8x256xf32>
    %21 = vector.broadcast %1 : vector<8x1xf32> to vector<8x256xf32>
    %22 = arith.addf %20, %21 : vector<8x256xf32>
    %c2_18 = arith.constant 2 : index
    %c0_19 = arith.constant 0 : index
    %c0_20 = arith.constant 0 : index
    %23 = vector.load %arg4[%c2_18, %c0_19, %c0_20] : memref<6x8x256xf32, #tpu.memory_space<vmem>>, vector<1x8x256xf32>
    %24 = vector.shape_cast %23 : vector<1x8x256xf32> to vector<8x256xf32>
    %25 = vector.shape_cast %22 : vector<8x256xf32> to vector<1x8x256xf32>
    tpu.vector_store %arg4[%c2_18, %c0_19, %c0_20], %25 {strides = array<i32>} : memref<6x8x256xf32, #tpu.memory_space<vmem>>, vector<1x8x256xf32>,
    %c3 = arith.constant 3 : index
    %c0_21 = arith.constant 0 : index
    %c0_22 = arith.constant 0 : index
    %26 = vector.load %arg3[%c3, %c0_21, %c0_22] : memref<6x48x256xbf16, #tpu.memory_space<vmem>>, vector<1x48x256xbf16>
    %27 = vector.shape_cast %26 : vector<1x48x256xbf16> to vector<48x256xbf16>
    %cst_23 = arith.constant dense<0.000000e+00> : vector<8x256xf32>
    %28 = tpu.matmul %0, %27, %cst_23 {dimension_numbers = #tpu.dot_dimension_numbers<[1], [0], [0], [1], [0, 0, 1, 1], [], []>} : vector<8x48xbf16>, vector<48x256xbf16>, vector<8x256xf32> -> vector<8x256xf32>
    %29 = vector.broadcast %1 : vector<8x1xf32> to vector<8x256xf32>
    %30 = arith.addf %28, %29 : vector<8x256xf32>
    %c3_24 = arith.constant 3 : index
    %c0_25 = arith.constant 0 : index
    %c0_26 = arith.constant 0 : index
    %31 = vector.load %arg4[%c3_24, %c0_25, %c0_26] : memref<6x8x256xf32, #tpu.memory_space<vmem>>, vector<1x8x256xf32>
    %32 = vector.shape_cast %31 : vector<1x8x256xf32> to vector<8x256xf32>
    %33 = vector.shape_cast %30 : vector<8x256xf32> to vector<1x8x256xf32>
    tpu.vector_store %arg4[%c3_24, %c0_25, %c0_26], %33 {strides = array<i32>} : memref<6x8x256xf32, #tpu.memory_space<vmem>>, vector<1x8x256xf32>,
    %c4 = arith.constant 4 : index
    %c0_27 = arith.constant 0 : index
    %c0_28 = arith.constant 0 : index
    %34 = vector.load %arg3[%c4, %c0_27, %c0_28] : memref<6x48x256xbf16, #tpu.memory_space<vmem>>, vector<1x48x256xbf16>
    %35 = vector.shape_cast %34 : vector<1x48x256xbf16> to vector<48x256xbf16>
    %cst_29 = arith.constant dense<0.000000e+00> : vector<8x256xf32>
    %36 = tpu.matmul %0, %35, %cst_29 {dimension_numbers = #tpu.dot_dimension_numbers<[1], [0], [0], [1], [0, 0, 1, 1], [], []>} : vector<8x48xbf16>, vector<48x256xbf16>, vector<8x256xf32> -> vector<8x256xf32>
    %37 = vector.broadcast %1 : vector<8x1xf32> to vector<8x256xf32>
    %38 = arith.addf %36, %37 : vector<8x256xf32>
    %c4_30 = arith.constant 4 : index
    %c0_31 = arith.constant 0 : index
    %c0_32 = arith.constant 0 : index
    %39 = vector.load %arg4[%c4_30, %c0_31, %c0_32] : memref<6x8x256xf32, #tpu.memory_space<vmem>>, vector<1x8x256xf32>
    %40 = vector.shape_cast %39 : vector<1x8x256xf32> to vector<8x256xf32>
    %41 = vector.shape_cast %38 : vector<8x256xf32> to vector<1x8x256xf32>
    tpu.vector_store %arg4[%c4_30, %c0_31, %c0_32], %41 {strides = array<i32>} : memref<6x8x256xf32, #tpu.memory_space<vmem>>, vector<1x8x256xf32>,
    %c5 = arith.constant 5 : index
    %c0_33 = arith.constant 0 : index
    %c0_34 = arith.constant 0 : index
    %42 = vector.load %arg3[%c5, %c0_33, %c0_34] : memref<6x48x256xbf16, #tpu.memory_space<vmem>>, vector<1x48x256xbf16>
    %43 = vector.shape_cast %42 : vector<1x48x256xbf16> to vector<48x256xbf16>
    %cst_35 = arith.constant dense<0.000000e+00> : vector<8x256xf32>
    %44 = tpu.matmul %0, %43, %cst_35 {dimension_numbers = #tpu.dot_dimension_numbers<[1], [0], [0], [1], [0, 0, 1, 1], [], []>} : vector<8x48xbf16>, vector<48x256xbf16>, vector<8x256xf32> -> vector<8x256xf32>
    %45 = vector.broadcast %1 : vector<8x1xf32> to vector<8x256xf32>
    %46 = arith.addf %44, %45 : vector<8x256xf32>
    %c5_36 = arith.constant 5 : index
    %c0_37 = arith.constant 0 : index
    %c0_38 = arith.constant 0 : index
    %47 = vector.load %arg4[%c5_36, %c0_37, %c0_38] : memref<6x8x256xf32, #tpu.memory_space<vmem>>, vector<1x8x256xf32>
    %48 = vector.shape_cast %47 : vector<1x8x256xf32> to vector<8x256xf32>
    %49 = vector.shape_cast %46 : vector<8x256xf32> to vector<1x8x256xf32>
    tpu.vector_store %arg4[%c5_36, %c0_37, %c0_38], %49 {strides = array<i32>} : memref<6x8x256xf32, #tpu.memory_space<vmem>>, vector<1x8x256xf32>,
    return
  }
  func.func @transform_0(%arg0: i32) -> (i32, i32) {
    %c0_i32 = arith.constant 0 : i32
    %c0_i32_0 = arith.constant 0 : i32
    %c0_i32_1 = arith.constant 0 : i32
    return %c0_i32, %c0_i32_0 : i32, i32
  }
  func.func @transform_1(%arg0: i32) -> (i32, i32) {
    %c0_i32 = arith.constant 0 : i32
    %c0_i32_0 = arith.constant 0 : i32
    %c0_i32_1 = arith.constant 0 : i32
    return %c0_i32, %c0_i32_0 : i32, i32
  }
  func.func @transform_2(%arg0: i32) -> (i32, i32, i32) {
    %c0_i32 = arith.constant 0 : i32
    %c0_i32_0 = arith.constant 0 : i32
    %c0_i32_1 = arith.constant 0 : i32
    return %arg0, %c0_i32, %c0_i32_0 : i32, i32, i32
  }
  func.func @transform_3(%arg0: i32) -> (i32, i32, i32) {
    %c0_i32 = arith.constant 0 : i32
    %c0_i32_0 = arith.constant 0 : i32
    %c0_i32_1 = arith.constant 0 : i32
    return %arg0, %c0_i32, %c0_i32_0 : i32, i32, i32
  }
}

</mosaic_0001>

<llo_original>
// kernel: module_parallel_forward.1
$region0: #{module_parallel_forward.1}
  #allocation0 [shape = 'u32[]', space=smem, size = 0x4, offset = 0x4, fixed_abs, tag = 'smem constant byte address 0x4 - core index']
  #allocation1 [shape = 'u32[72,128]{1,0:T(1,128)}', space=vmem, size = 0x9000, scoped, tag = 'internal scratch']
  %s0 = inlined_call_operand.vmem [shape: bf16[8,48], index: 0, kind: input, shape index: {}]
  %s1 = inlined_call_operand.vmem [shape: f32[8,1], index: 1, kind: input, shape index: {}]
  %s2 = inlined_call_operand.vmem [shape: bf16[6,48,256], index: 2, kind: input, shape index: {}]
  %s3 = inlined_call_operand.vmem [shape: f32[6,8,256], index: 3, kind: output, shape index: {}]
  %s4 = sld [smem:[#allocation0]]
  $region22: #{module_parallel_forward.1} parent=0
    _
  %s6 = ssub.s32 1, %s4
  %s7 = scalar_select 0, %s6, %s4
  // Predicated region
  $region2: #{module_parallel_forward.1} parent=0 // pred_check
    _
  $region3: #{module_parallel_forward.1} parent=0 // pred_check_branch
    %9 = sbr.rel (0) target = $region5
  $region4: #{module_parallel_forward.1} parent=0 // pred_region
    _
  $region5: #{module_parallel_forward.1} parent=0 // pred_fallthru
    _
  // Predicated region
  $region6: #{module_parallel_forward.1} parent=0 // pred_check
    _
  $region7: #{module_parallel_forward.1} parent=0 // pred_check_branch
    %11 = sbr.rel (0) target = $region9
  $region8: #{module_parallel_forward.1} parent=0 // pred_region
    _
  $region9: #{module_parallel_forward.1} parent=0 // pred_fallthru
    _
  // Predicated region
  $region10: #{module_parallel_forward.1} parent=0 // pred_check
    _
  $region11: #{module_parallel_forward.1} parent=0 // pred_check_branch
    %13 = sbr.rel (0) target = $region13
  $region12: #{module_parallel_forward.1} parent=0 // pred_region
    _
  $region13: #{module_parallel_forward.1} parent=0 // pred_fallthru
    _
  %v15 = vld [vmem:[%s0] sm:$0xf]
  %v16 = vld [vmem:[%s1] sm:$0xff]
  %v17 = vld [vmem:[%s2] sm:$0xff]
  %v18 = vld [vmem:[%s2 + $0x8] sm:$0xff]
  %v19 = vld [vmem:[%s2 + $0x10] sm:$0xff]
  %v20 = vld [vmem:[%s2 + $0x18] sm:$0xff]
  %v21 = vld [vmem:[%s2 + $0x20] sm:$0xff]
  %v22 = vld [vmem:[%s2 + $0x28] sm:$0xff]
  %24 = vset.pattern.permute.xlu0 0
  %25 = vperm.xlu0 %24, %v16
  %v26 = vpop.permute.xlu0 %25
  %v34 = vunpack.c.l.b16 %v17
  %v35 = vunpack.c.h.b16 %v17
  %v36 = vunpack.c.l.b16 %v18
  %v37 = vunpack.c.h.b16 %v18
  %v38 = vunpack.c.l.b16 %v19
  %v39 = vunpack.c.h.b16 %v19
  %v40 = vunpack.c.l.b16 %v20
  %v41 = vunpack.c.h.b16 %v20
  %v42 = vunpack.c.l.b16 %v21
  %v43 = vunpack.c.h.b16 %v21
  %v44 = vunpack.c.l.b16 %v22
  %v45 = vunpack.c.h.b16 %v22
  %v46 = vpack.c.b16 %v36, %v34
  %v47 = vpack.c.b16 %v37, %v35
  %v48 = vpack.c.b16 %v40, %v38
  %v49 = vpack.c.b16 %v41, %v39
  %v50 = vpack.c.b16 %v44, %v42
  %v51 = vpack.c.b16 %v45, %v43
  %vm58 = vcmask 392192
  %v60 = vsel %vm58, %v15, 0
  %62 = vmatpush.bf16.msra.mxu0 0
  %63 = vmatpush.bf16.msra.mxu0 0
  %64 = vmatpush.bf16.msra.mxu0 0
  %65 = vmatpush.bf16.msra.mxu0 0
  %66 = vmatpush.bf16.msra.mxu0 0
  %67 = vmatpush.bf16.msra.mxu0 %v50
  %68 = vmatpush.bf16.msra.mxu0 %v48
  %69 = vmatpush.bf16.msra.mxu0 %v46
  %70 = vmatmul.bf16.gmra.mxu0 %v60
  %v71 = vpop.f32.mrf.mxu0
  %v72 = vadd.f32 %v26, %v71
  %v73 = vpop.f32.mrf.mxu0
  %74 = vdwg.mxu0
  %75 = vmatpush.bf16.msra.mxu0 0
  %76 = vmatpush.bf16.msra.mxu0 0
  %77 = vmatpush.bf16.msra.mxu0 0
  %78 = vmatpush.bf16.msra.mxu0 0
  %79 = vmatpush.bf16.msra.mxu0 0
  %80 = vmatpush.bf16.msra.mxu0 %v51
  %81 = vmatpush.bf16.msra.mxu0 %v49
  %82 = vmatpush.bf16.msra.mxu0 %v47
  %83 = vmatmul.bf16.gmra.mxu0 %v60
  %v84 = vpop.f32.mrf.mxu0
  %v85 = vadd.f32 %v26, %v84
  %v86 = vpop.f32.mrf.mxu0
  %87 = vdwg.mxu0
  %88 = vst [vmem:[%s3] sm:$0xff] %v72
  %89 = vst [vmem:[%s3 + $0x8] sm:$0xff] %v85
  %s90 = scalar_lea.vmem %s2, 48
  %v91 = vld [vmem:[%s90] sm:$0xff]
  %v92 = vld [vmem:[%s90 + $0x8] sm:$0xff]
  %v93 = vld [vmem:[%s90 + $0x10] sm:$0xff]
  %v94 = vld [vmem:[%s90 + $0x18] sm:$0xff]
  %v95 = vld [vmem:[%s90 + $0x20] sm:$0xff]
  %v96 = vld [vmem:[%s90 + $0x28] sm:$0xff]
  %v103 = vunpack.c.l.b16 %v91
  %v104 = vunpack.c.h.b16 %v91
  %v105 = vunpack.c.l.b16 %v92
  %v106 = vunpack.c.h.b16 %v92
  %v107 = vunpack.c.l.b16 %v93
  %v108 = vunpack.c.h.b16 %v93
  %v109 = vunpack.c.l.b16 %v94
  %v110 = vunpack.c.h.b16 %v94
  %v111 = vunpack.c.l.b16 %v95
  %v112 = vunpack.c.h.b16 %v95
  %v113 = vunpack.c.l.b16 %v96
  %v114 = vunpack.c.h.b16 %v96
  %v115 = vpack.c.b16 %v105, %v103
  %v116 = vpack.c.b16 %v106, %v104
  %v117 = vpack.c.b16 %v109, %v107
  %v118 = vpack.c.b16 %v110, %v108
  %v119 = vpack.c.b16 %v113, %v111
  %v120 = vpack.c.b16 %v114, %v112
  %127 = vmatpush.bf16.msra.mxu0 0
  %128 = vmatpush.bf16.msra.mxu0 0
  %129 = vmatpush.bf16.msra.mxu0 0
  %130 = vmatpush.bf16.msra.mxu0 0
  %131 = vmatpush.bf16.msra.mxu0 0
  %132 = vmatpush.bf16.msra.mxu0 %v119
  %133 = vmatpush.bf16.msra.mxu0 %v117
  %134 = vmatpush.bf16.msra.mxu0 %v115
  %135 = vmatmul.bf16.gmra.mxu0 %v60
  %v136 = vpop.f32.mrf.mxu0
  %v137 = vadd.f32 %v26, %v136
  %v138 = vpop.f32.mrf.mxu0
  %139 = vdwg.mxu0
  %140 = vmatpush.bf16.msra.mxu0 0
  %141 = vmatpush.bf16.msra.mxu0 0
  %142 = vmatpush.bf16.msra.mxu0 0
  %143 = vmatpush.bf16.msra.mxu0 0
  %144 = vmatpush.bf16.msra.mxu0 0
  %145 = vmatpush.bf16.msra.mxu0 %v120
  %146 = vmatpush.bf16.msra.mxu0 %v118
  %147 = vmatpush.bf16.msra.mxu0 %v116
  %148 = vmatmul.bf16.gmra.mxu0 %v60
  %v149 = vpop.f32.mrf.mxu0
  %v150 = vadd.f32 %v26, %v149
  %v151 = vpop.f32.mrf.mxu0
  %152 = vdwg.mxu0
  %s153 = scalar_lea.vmem %s3, 16
  %154 = vst [vmem:[%s153] sm:$0xff] %v137
  %155 = vst [vmem:[%s153 + $0x8] sm:$0xff] %v150
  %s156 = scalar_lea.vmem %s2, 96
  %v157 = vld [vmem:[%s156] sm:$0xff]
  %v158 = vld [vmem:[%s156 + $0x8] sm:$0xff]
  %v159 = vld [vmem:[%s156 + $0x10] sm:$0xff]
  %v160 = vld [vmem:[%s156 + $0x18] sm:$0xff]
  %v161 = vld [vmem:[%s156 + $0x20] sm:$0xff]
  %v162 = vld [vmem:[%s156 + $0x28] sm:$0xff]
  %v169 = vunpack.c.l.b16 %v157
  %v170 = vunpack.c.h.b16 %v157
  %v171 = vunpack.c.l.b16 %v158
  %v172 = vunpack.c.h.b16 %v158
  %v173 = vunpack.c.l.b16 %v159
  %v174 = vunpack.c.h.b16 %v159
  %v175 = vunpack.c.l.b16 %v160
  %v176 = vunpack.c.h.b16 %v160
  %v177 = vunpack.c.l.b16 %v161
  %v178 = vunpack.c.h.b16 %v161
  %v179 = vunpack.c.l.b16 %v162
  %v180 = vunpack.c.h.b16 %v162
  %v181 = vpack.c.b16 %v171, %v169
  %v182 = vpack.c.b16 %v172, %v170
  %v183 = vpack.c.b16 %v175, %v173
  %v184 = vpack.c.b16 %v176, %v174
  %v185 = vpack.c.b16 %v179, %v177
  %v186 = vpack.c.b16 %v180, %v178
  %193 = vmatpush.bf16.msra.mxu0 0
  %194 = vmatpush.bf16.msra.mxu0 0
  %195 = vmatpush.bf16.msra.mxu0 0
  %196 = vmatpush.bf16.msra.mxu0 0
  %197 = vmatpush.bf16.msra.mxu0 0
  %198 = vmatpush.bf16.msra.mxu0 %v185
  %199 = vmatpush.bf16.msra.mxu0 %v183
  %200 = vmatpush.bf16.msra.mxu0 %v181
  %201 = vmatmul.bf16.gmra.mxu0 %v60
  %v202 = vpop.f32.mrf.mxu0
  %v203 = vadd.f32 %v26, %v202
  %v204 = vpop.f32.mrf.mxu0
  %205 = vdwg.mxu0
  %206 = vmatpush.bf16.msra.mxu0 0
  %207 = vmatpush.bf16.msra.mxu0 0
  %208 = vmatpush.bf16.msra.mxu0 0
  %209 = vmatpush.bf16.msra.mxu0 0
  %210 = vmatpush.bf16.msra.mxu0 0
  %211 = vmatpush.bf16.msra.mxu0 %v186
  %212 = vmatpush.bf16.msra.mxu0 %v184
  %213 = vmatpush.bf16.msra.mxu0 %v182
  %214 = vmatmul.bf16.gmra.mxu0 %v60
  %v215 = vpop.f32.mrf.mxu0
  %v216 = vadd.f32 %v26, %v215
  %v217 = vpop.f32.mrf.mxu0
  %218 = vdwg.mxu0
  %s219 = scalar_lea.vmem %s3, 32
  %220 = vst [vmem:[%s219] sm:$0xff] %v203
  %221 = vst [vmem:[%s219 + $0x8] sm:$0xff] %v216
  %s222 = scalar_lea.vmem %s2, 144
  %v223 = vld [vmem:[%s222] sm:$0xff]
  %v224 = vld [vmem:[%s222 + $0x8] sm:$0xff]
  %v225 = vld [vmem:[%s222 + $0x10] sm:$0xff]
  %v226 = vld [vmem:[%s222 + $0x18] sm:$0xff]
  %v227 = vld [vmem:[%s222 + $0x20] sm:$0xff]
  %v228 = vld [vmem:[%s222 + $0x28] sm:$0xff]
  %v235 = vunpack.c.l.b16 %v223
  %v236 = vunpack.c.h.b16 %v223
  %v237 = vunpack.c.l.b16 %v224
  %v238 = vunpack.c.h.b16 %v224
  %v239 = vunpack.c.l.b16 %v225
  %v240 = vunpack.c.h.b16 %v225
  %v241 = vunpack.c.l.b16 %v226
  %v242 = vunpack.c.h.b16 %v226
  %v243 = vunpack.c.l.b16 %v227
  %v244 = vunpack.c.h.b16 %v227
  %v245 = vunpack.c.l.b16 %v228
  %v246 = vunpack.c.h.b16 %v228
  %v247 = vpack.c.b16 %v237, %v235
  %v248 = vpack.c.b16 %v238, %v236
  %v249 = vpack.c.b16 %v241, %v239
  %v250 = vpack.c.b16 %v242, %v240
  %v251 = vpack.c.b16 %v245, %v243
  %v252 = vpack.c.b16 %v246, %v244
  %259 = vmatpush.bf16.msra.mxu0 0
  %260 = vmatpush.bf16.msra.mxu0 0
  %261 = vmatpush.bf16.msra.mxu0 0
  %262 = vmatpush.bf16.msra.mxu0 0
  %263 = vmatpush.bf16.msra.mxu0 0
  %264 = vmatpush.bf16.msra.mxu0 %v251
  %265 = vmatpush.bf16.msra.mxu0 %v249
  %266 = vmatpush.bf16.msra.mxu0 %v247
  %267 = vmatmul.bf16.gmra.mxu0 %v60
  %v268 = vpop.f32.mrf.mxu0
  %v269 = vadd.f32 %v26, %v268
  %v270 = vpop.f32.mrf.mxu0
  %271 = vdwg.mxu0
  %272 = vmatpush.bf16.msra.mxu0 0
  %273 = vmatpush.bf16.msra.mxu0 0
  %274 = vmatpush.bf16.msra.mxu0 0
  %275 = vmatpush.bf16.msra.mxu0 0
  %276 = vmatpush.bf16.msra.mxu0 0
  %277 = vmatpush.bf16.msra.mxu0 %v252
  %278 = vmatpush.bf16.msra.mxu0 %v250
  %279 = vmatpush.bf16.msra.mxu0 %v248
  %280 = vmatmul.bf16.gmra.mxu0 %v60
  %v281 = vpop.f32.mrf.mxu0
  %v282 = vadd.f32 %v26, %v281
  %v283 = vpop.f32.mrf.mxu0
  %284 = vdwg.mxu0
  %s285 = scalar_lea.vmem %s3, 48
  %286 = vst [vmem:[%s285] sm:$0xff] %v269
  %287 = vst [vmem:[%s285 + $0x8] sm:$0xff] %v282
  %s288 = scalar_lea.vmem %s2, 192
  %v289 = vld [vmem:[%s288] sm:$0xff]
  %v290 = vld [vmem:[%s288 + $0x8] sm:$0xff]
  %v291 = vld [vmem:[%s288 + $0x10] sm:$0xff]
  %v292 = vld [vmem:[%s288 + $0x18] sm:$0xff]
  %v293 = vld [vmem:[%s288 + $0x20] sm:$0xff]
  %v294 = vld [vmem:[%s288 + $0x28] sm:$0xff]
  %v301 = vunpack.c.l.b16 %v289
  %v302 = vunpack.c.h.b16 %v289
  %v303 = vunpack.c.l.b16 %v290
  %v304 = vunpack.c.h.b16 %v290
  %v305 = vunpack.c.l.b16 %v291
  %v306 = vunpack.c.h.b16 %v291
  %v307 = vunpack.c.l.b16 %v292
  %v308 = vunpack.c.h.b16 %v292
  %v309 = vunpack.c.l.b16 %v293
  %v310 = vunpack.c.h.b16 %v293
  %v311 = vunpack.c.l.b16 %v294
  %v312 = vunpack.c.h.b16 %v294
  %v313 = vpack.c.b16 %v303, %v301
  %v314 = vpack.c.b16 %v304, %v302
  %v315 = vpack.c.b16 %v307, %v305
  %v316 = vpack.c.b16 %v308, %v306
  %v317 = vpack.c.b16 %v311, %v309
  %v318 = vpack.c.b16 %v312, %v310
  %325 = vmatpush.bf16.msra.mxu0 0
  %326 = vmatpush.bf16.msra.mxu0 0
  %327 = vmatpush.bf16.msra.mxu0 0
  %328 = vmatpush.bf16.msra.mxu0 0
  %329 = vmatpush.bf16.msra.mxu0 0
  %330 = vmatpush.bf16.msra.mxu0 %v317
  %331 = vmatpush.bf16.msra.mxu0 %v315
  %332 = vmatpush.bf16.msra.mxu0 %v313
  %333 = vmatmul.bf16.gmra.mxu0 %v60
  %v334 = vpop.f32.mrf.mxu0
  %v335 = vadd.f32 %v26, %v334
  %v336 = vpop.f32.mrf.mxu0
  %337 = vdwg.mxu0
  %338 = vmatpush.bf16.msra.mxu0 0
  %339 = vmatpush.bf16.msra.mxu0 0
  %340 = vmatpush.bf16.msra.mxu0 0
  %341 = vmatpush.bf16.msra.mxu0 0
  %342 = vmatpush.bf16.msra.mxu0 0
  %343 = vmatpush.bf16.msra.mxu0 %v318
  %344 = vmatpush.bf16.msra.mxu0 %v316
  %345 = vmatpush.bf16.msra.mxu0 %v314
  %346 = vmatmul.bf16.gmra.mxu0 %v60
  %v347 = vpop.f32.mrf.mxu0
  %v348 = vadd.f32 %v26, %v347
  %v349 = vpop.f32.mrf.mxu0
  %350 = vdwg.mxu0
  %s351 = scalar_lea.vmem %s3, 64
  %352 = vst [vmem:[%s351] sm:$0xff] %v335
  %353 = vst [vmem:[%s351 + $0x8] sm:$0xff] %v348
  %s354 = scalar_lea.vmem %s2, 240
  %v355 = vld [vmem:[%s354] sm:$0xff]
  %v356 = vld [vmem:[%s354 + $0x8] sm:$0xff]
  %v357 = vld [vmem:[%s354 + $0x10] sm:$0xff]
  %v358 = vld [vmem:[%s354 + $0x18] sm:$0xff]
  %v359 = vld [vmem:[%s354 + $0x20] sm:$0xff]
  %v360 = vld [vmem:[%s354 + $0x28] sm:$0xff]
  %v367 = vunpack.c.l.b16 %v355
  %v368 = vunpack.c.h.b16 %v355
  %v369 = vunpack.c.l.b16 %v356
  %v370 = vunpack.c.h.b16 %v356
  %v371 = vunpack.c.l.b16 %v357
  %v372 = vunpack.c.h.b16 %v357
  %v373 = vunpack.c.l.b16 %v358
  %v374 = vunpack.c.h.b16 %v358
  %v375 = vunpack.c.l.b16 %v359
  %v376 = vunpack.c.h.b16 %v359
  %v377 = vunpack.c.l.b16 %v360
  %v378 = vunpack.c.h.b16 %v360
  %v379 = vpack.c.b16 %v369, %v367
  %v380 = vpack.c.b16 %v370, %v368
  %v381 = vpack.c.b16 %v373, %v371
  %v382 = vpack.c.b16 %v374, %v372
  %v383 = vpack.c.b16 %v377, %v375
  %v384 = vpack.c.b16 %v378, %v376
  %391 = vmatpush.bf16.msra.mxu0 0
  %392 = vmatpush.bf16.msra.mxu0 0
  %393 = vmatpush.bf16.msra.mxu0 0
  %394 = vmatpush.bf16.msra.mxu0 0
  %395 = vmatpush.bf16.msra.mxu0 0
  %396 = vmatpush.bf16.msra.mxu0 %v383
  %397 = vmatpush.bf16.msra.mxu0 %v381
  %398 = vmatpush.bf16.msra.mxu0 %v379
  %399 = vmatmul.bf16.gmra.mxu0 %v60
  %v400 = vpop.f32.mrf.mxu0
  %v401 = vadd.f32 %v26, %v400
  %v402 = vpop.f32.mrf.mxu0
  %403 = vdwg.mxu0
  %404 = vmatpush.bf16.msra.mxu0 0
  %405 = vmatpush.bf16.msra.mxu0 0
  %406 = vmatpush.bf16.msra.mxu0 0
  %407 = vmatpush.bf16.msra.mxu0 0
  %408 = vmatpush.bf16.msra.mxu0 0
  %409 = vmatpush.bf16.msra.mxu0 %v384
  %410 = vmatpush.bf16.msra.mxu0 %v382
  %411 = vmatpush.bf16.msra.mxu0 %v380
  %412 = vmatmul.bf16.gmra.mxu0 %v60
  %v413 = vpop.f32.mrf.mxu0
  %v414 = vadd.f32 %v26, %v413
  %v415 = vpop.f32.mrf.mxu0
  %416 = vdwg.mxu0
  %s417 = scalar_lea.vmem %s3, 80
  %418 = vst [vmem:[%s417] sm:$0xff] %v401
  %419 = vst [vmem:[%s417 + $0x8] sm:$0xff] %v414
  // Predicated region
  $region14: #{module_parallel_forward.1} parent=0 // pred_check
    _
  $region15: #{module_parallel_forward.1} parent=0 // pred_check_branch
    %421 = sbr.rel (0) target = $region17
  $region16: #{module_parallel_forward.1} parent=0 // pred_region
    _
  $region17: #{module_parallel_forward.1} parent=0 // pred_fallthru
    _
  // Predicated region
  $region18: #{module_parallel_forward.1} parent=0 // pred_check
    _
  $region19: #{module_parallel_forward.1} parent=0 // pred_check_branch
    %423 = sbr.rel (0) target = $region21
  $region20: #{module_parallel_forward.1} parent=0 // pred_region
    _
  $region21: #{module_parallel_forward.1} parent=0 // pred_fallthru
    _

</llo_original>
